<compile_context>
chip_gen: v7x
topology: tpu7x:2x2x1
jax: 0.10.0
libtpu: 0.0.40
codegen_flags: <defaults>
</compile_context>

<pallas_src>
import functools

import jax
import jax.numpy as jnp
from jax.experimental import pallas as pl
from jax.experimental.pallas import tpu as pltpu


def _swish_kernel(x_ref, o_ref, *, compute_dtype):
    x = x_ref[...].astype(compute_dtype)
    o_ref[...] = (jax.nn.sigmoid(x) * x).astype(o_ref.dtype)


def _round_up(a: int, b: int) -> int:
    return ((a + b - 1) // b) * b


def _chip_config():
    """Per-generation tuning: (target block bytes, vmem limit, native bf16 compute)."""
    try:
        kind = jax.devices()[0].device_kind.lower()
    except Exception:  # pragma: no cover - defensive; assume conservative defaults
        kind = ""
    if "v7" in kind or "7x" in kind:
        # ~3.2 TB/s HBM/TC, 64 MiB physical VMEM/TC: 6 MiB blocks (24 MiB live
        # double-buffered in+out) under an explicit 40 MiB scoped-VMEM limit.
        return {"block_bytes": 6 << 20, "vmem_limit": 40 << 20, "native_bf16": True}
    if "v6" in kind:
        # ~1.4 TB/s HBM, 128 MiB physical VMEM: 8 MiB blocks, raise limit to 48 MiB.
        return {"block_bytes": 8 << 20, "vmem_limit": 48 << 20, "native_bf16": True}
    # v5e / older / unknown: 2 MiB blocks are already near roofline and 4 live
    # buffers exactly fit the 16 MiB default scoped VMEM; no bf16 VPU/EUP.
    return {"block_bytes": 2 << 20, "vmem_limit": None, "native_bf16": False}


def swish(x: jax.Array, *, target_block_bytes: int | None = None) -> jax.Array:
    """Swish / SiLU: sigmoid(x) * x, matching torch.sigmoid(x) * x."""
    orig_shape = x.shape
    dtype = x.dtype
    n = x.size
    if n == 0:
        return x

    cfg = _chip_config()
    if target_block_bytes is None:
        target_block_bytes = cfg["block_bytes"]

    itemsize = jnp.dtype(dtype).itemsize
    # vreg sublane granularity: 8 for 4-byte, 16 for 2-byte, 32 for 1-byte dtypes.
    sub = max(8, 32 // max(itemsize, 1))
    gran = sub * 128  # one full vreg worth of elements

    # bf16 computes natively on v6e/v7x (halves vreg pressure & EUP work);
    # everything else (incl. f32, and bf16 on v5e) goes through f32.
    if cfg["native_bf16"] and dtype == jnp.bfloat16:
        compute_dtype = dtype
    else:
        compute_dtype = jnp.float32
    kernel = functools.partial(_swish_kernel, compute_dtype=compute_dtype)

    cparams_kwargs = {"dimension_semantics": ("parallel",)}
    if cfg["vmem_limit"] is not None:
        cparams_kwargs["vmem_limit_bytes"] = cfg["vmem_limit"]
    cparams = pltpu.CompilerParams(**cparams_kwargs)

    x_flat = jnp.ravel(x)

    # Zero-copy 2D path: widest lane-dense width that divides n exactly.
    lanes = None
    for w in (1024, 512, 256, 128):
        if n % w == 0:
            lanes = w
            break

    if lanes is not None:
        rows = n // lanes
        row_bytes = lanes * itemsize
        target_rows = max(sub, (target_block_bytes // row_bytes) // sub * sub)
        if rows >= 2 * sub:
            # Ensure >= 2 grid steps (balanced) so v7x megacore uses both TCs.
            block_rows = min(target_rows, _round_up(pl.cdiv(rows, 2), sub))
        else:
            block_rows = rows  # tiny tensor: single full-extent block
        grid = (pl.cdiv(rows, block_rows),)

        out2d = pl.pallas_call(
            kernel,
            out_shape=jax.ShapeDtypeStruct((rows, lanes), dtype),
            grid_spec=pltpu.PrefetchScalarGridSpec(
                num_scalar_prefetch=0,
                grid=grid,
                in_specs=[pl.BlockSpec((block_rows, lanes), lambda i: (i, 0))],
                out_specs=pl.BlockSpec((block_rows, lanes), lambda i: (i, 0)),
            ),
            compiler_params=cparams,
        )(x_flat.reshape(rows, lanes))
        return out2d.reshape(orig_shape)

    # Fallback (n % 128 != 0): 1D blocks over the flat array, cdiv grid, Pallas
    # masks the partial last block. No padding copy, no output slice copy.
    if n <= gran:
        block_elems = n  # full-extent single block (any size legal)
    else:
        target_elems = max(gran, (target_block_bytes // itemsize) // gran * gran)
        block_elems = min(target_elems, _round_up(pl.cdiv(n, 2), gran))
    grid = (pl.cdiv(n, block_elems),)

    out1d = pl.pallas_call(
        kernel,
        out_shape=jax.ShapeDtypeStruct((n,), dtype),
        grid_spec=pltpu.PrefetchScalarGridSpec(
            num_scalar_prefetch=0,
            grid=grid,
            in_specs=[pl.BlockSpec((block_elems,), lambda i: (i,))],
            out_specs=pl.BlockSpec((block_elems,), lambda i: (i,)),
        ),
        compiler_params=cparams,
    )(x_flat)
    return out1d.reshape(orig_shape)


if __name__ == "__main__":
    key = jax.random.PRNGKey(0)

    # 1) Small NCHW-like input consistent with how Swish is used in the module.
    x = jax.random.normal(key, (2, 4, 16, 16), dtype=jnp.float32)
    y = swish(x)
    jax.block_until_ready(y)
    y_ref = jax.nn.sigmoid(x) * x
    assert y.shape == x.shape and y.dtype == x.dtype
    assert jnp.allclose(y, y_ref, atol=1e-6, rtol=1e-6)

    # 2) Multi-block 2D path (rows split across >= 2 grid steps).
    x_big = jax.random.normal(jax.random.PRNGKey(2), (4, 8, 64, 64), dtype=jnp.float32)
    y_big = swish(x_big)
    jax.block_until_ready(y_big)
    assert jnp.allclose(y_big, jax.nn.sigmoid(x_big) * x_big, atol=1e-6, rtol=1e-6)

    # 3) Non-128-divisible, single-block 1D path.
    x_odd = jax.random.normal(jax.random.PRNGKey(1), (3, 5, 7), dtype=jnp.float32)
    y_odd = swish(x_odd)
    jax.block_until_ready(y_odd)
    assert y_odd.shape == x_odd.shape and y_odd.dtype == x_odd.dtype
    assert jnp.allclose(y_odd, jax.nn.sigmoid(x_odd) * x_odd, atol=1e-6, rtol=1e-6)

    # 4) Non-128-divisible, multi-block masked 1D path (2048 + masked tail).
    x_rag = jax.random.normal(jax.random.PRNGKey(3), (5, 429), dtype=jnp.float32)
    y_rag = swish(x_rag)
    jax.block_until_ready(y_rag)
    assert jnp.allclose(y_rag, jax.nn.sigmoid(x_rag) * x_rag, atol=1e-6, rtol=1e-6)

    # 5) bf16 path (native compute on v6e/v7x, f32 upcast elsewhere).
    x_bf = jax.random.normal(jax.random.PRNGKey(4), (2, 4, 16, 16), dtype=jnp.bfloat16)
    y_bf = swish(x_bf)
    jax.block_until_ready(y_bf)
    xf = x_bf.astype(jnp.float32)
    y_bf_ref = (jax.nn.sigmoid(xf) * xf).astype(jnp.bfloat16)
    assert y_bf.shape == x_bf.shape and y_bf.dtype == x_bf.dtype
    assert jnp.allclose(
        y_bf.astype(jnp.float32), y_bf_ref.astype(jnp.float32), atol=2e-2, rtol=2e-2
    )

    print("KERNEL_OK")
</pallas_src>

<mosaic_0001>
module attributes {stable_mosaic.version = 11 : i64} {
  func.func @_swish_kernel(%arg0: i32, %arg1: memref<2x1024xf32, #tpu.memory_space<vmem>>, %arg2: memref<2x1024xf32, #tpu.memory_space<vmem>>) attributes {dimension_semantics = [#tpu.dimension_semantics<parallel>], iteration_bounds = array<i64: 1>, scalar_prefetch = 0 : i64, scratch_operands = 0 : i64, tpu.core_type = #tpu.core_type<tc>, window_params = [{transform_indices = @transform_0, window_bounds = array<i64: 2, 1024>}, {transform_indices = @transform_1, window_bounds = array<i64: 2, 1024>}]} {
    %c0 = arith.constant 0 : index
    %c0_0 = arith.constant 0 : index
    %0 = vector.load %arg1[%c0, %c0_0] : memref<2x1024xf32, #tpu.memory_space<vmem>>, vector<2x1024xf32>
    %1 = arith.negf %0 : vector<2x1024xf32>
    %2 = math.exp %1 : vector<2x1024xf32>
    %cst = arith.constant 1.000000e+00 : f32
    %3 = vector.broadcast %cst : f32 to vector<2x1024xf32>
    %4 = arith.addf %3, %2 : vector<2x1024xf32>
    %5 = arith.divf %3, %4 : vector<2x1024xf32>
    %6 = arith.mulf %5, %0 : vector<2x1024xf32>
    %c0_1 = arith.constant 0 : index
    %c0_2 = arith.constant 0 : index
    %7 = vector.load %arg2[%c0_1, %c0_2] : memref<2x1024xf32, #tpu.memory_space<vmem>>, vector<2x1024xf32>
    tpu.vector_store %arg2[%c0_1, %c0_2], %6 {strides = array<i32>} : memref<2x1024xf32, #tpu.memory_space<vmem>>, vector<2x1024xf32>,
    return
  }
  func.func @transform_0(%arg0: i32) -> (i32, i32) {
    %c0_i32 = arith.constant 0 : i32
    %c0_i32_0 = arith.constant 0 : i32
    return %arg0, %c0_i32 : i32, i32
  }
  func.func @transform_1(%arg0: i32) -> (i32, i32) {
    %c0_i32 = arith.constant 0 : i32
    %c0_i32_0 = arith.constant 0 : i32
    return %arg0, %c0_i32 : i32, i32
  }
}

</mosaic_0001>

<llo_original>
// kernel: tpu_custom_call.1
$region0: #{tpu_custom_call.1}
  #allocation0 [shape = 'u32[]', space=smem, size = 0x4, offset = 0x4, fixed_abs, tag = 'smem constant byte address 0x4 - core index']
  #allocation1 [shape = 'u32[144,128]{1,0:T(1,128)}', space=vmem, size = 0x12000, scoped, tag = 'internal scratch']
  %s0 = inlined_call_operand.hbm [shape: f32[2,1024], index: 0, kind: input, shape index: {}]
  %s1 = inlined_call_operand.hbm [shape: f32[2,1024], index: 1, kind: output, shape index: {}]
  %s2 = sld [smem:[#allocation0]]
  $region18: #{tpu_custom_call.1} parent=0
    _
  %s4 = ssub.s32 1, %s2
  %s5 = scalar_select 0, %s4, %s2
  $region1: #{tpu_custom_call.1} parent=0
    #allocation2 [shape = 'u8[8192]{0}', space=vmem, size = 0x2000, scoped, tag = 'input window, operand 0, single buffered']
    #allocation3 [shape = 's32[1]{0}', space=sflag, size = 0x4, scoped, tag = 'scoped memory for tpu_custom_call.1']
    #allocation4 [shape = 's32[1]{0}', space=sflag, size = 0x4, scoped, tag = 'scoped memory for tpu_custom_call.1']
    #allocation5 [shape = 'u8[8192]{0}', space=vmem, size = 0x2000, scoped, tag = 'output window, operand 0, single buffered']
    %6 = vsyncpa [#allocation3], 0
    %7 = vsyncpa [#allocation4], 0
    // Predicated region
    $region2: #{tpu_custom_call.1} parent=1 // pred_check
      _
    $region3: #{tpu_custom_call.1} parent=1 // pred_check_branch
      %9 = sbr.rel (0) target = $region5
    $region4: #{tpu_custom_call.1} parent=1 // pred_region
      %s11 = ssub.s32 256, 256
      %12 = vsyncadd [#allocation3], %s11
      %s14 = sshll.u32 [#allocation2], 4
      %s15 = int_to_ptr.vmem [resolvable:$true] %s14
      %17 = dma.hbm_to_vmem [thread:$0]  %s0, 256, %s15, [#allocation3]
    $region5: #{tpu_custom_call.1} parent=1 // pred_fallthru
      _
    // Predicated region
    $region6: #{tpu_custom_call.1} parent=1 // pred_check
      _
    $region7: #{tpu_custom_call.1} parent=1 // pred_check_branch
      %19 = sbr.rel (0) target = $region9
    $region8: #{tpu_custom_call.1} parent=1 // pred_region
      %20 = dma.done [#allocation3], 256
    $region9: #{tpu_custom_call.1} parent=1 // pred_fallthru
      _
    %v21 = vld [vmem:[#allocation2] sm:$0xff]
    %v22 = vld [vmem:[#allocation2 + $0x8] sm:$0xff]
    %v23 = vxor.u32 %v21, 2147483648
    %v24 = vxor.u32 %v22, 2147483648
    %v25 = vmul.f32 %v23, 1.442695
    %v26 = vpow.pop %v25
    %v27 = vmul.f32 %v24, 1.442695
    %v28 = vpow.pop %v27
    %v29 = vadd.f32 %v26, 1.0
    %v30 = vadd.f32 %v28, 1.0
    %v31 = vrcp.pop %v29
    %v32 = vmul.f32 1.0, %v31
    %v33 = vrcp.pop %v30
    %v34 = vmul.f32 1.0, %v33
    %v35 = vmul.f32 %v32, %v21
    %v36 = vmul.f32 %v34, %v22
    %37 = vst [vmem:[#allocation5] sm:$0xff] %v35
    %38 = vst [vmem:[#allocation5 + $0x8] sm:$0xff] %v36
    // Predicated region
    $region10: #{tpu_custom_call.1} parent=1 // pred_check
      _
    $region11: #{tpu_custom_call.1} parent=1 // pred_check_branch
      %40 = sbr.rel (0) target = $region13
    $region12: #{tpu_custom_call.1} parent=1 // pred_region
      %s42 = ssub.s32 256, 256
      %43 = vsyncadd [#allocation4], %s42
      %s45 = sshll.u32 [#allocation5], 4
      %s46 = int_to_ptr.vmem [resolvable:$true] %s45
      %48 = dma.vmem_to_hbm [thread:$0]  %s46, 256, %s1, [#allocation4]
    $region13: #{tpu_custom_call.1} parent=1 // pred_fallthru
      _
    // Predicated region
    $region14: #{tpu_custom_call.1} parent=1 // pred_check
      _
    $region15: #{tpu_custom_call.1} parent=1 // pred_check_branch
      %50 = sbr.rel (0) target = $region17
    $region16: #{tpu_custom_call.1} parent=1 // pred_region
      %51 = dma.done [#allocation4], 256
    $region17: #{tpu_custom_call.1} parent=1 // pred_fallthru
      _
    %52 = vsyncpa [#allocation3], 1
    %53 = vsyncpa [#allocation4], 1

</llo_original>
